<compile_context>
chip_gen: v6e
topology: v6e:2x2x1
jax: 0.10.0
libtpu: 0.0.40
codegen_flags: <defaults>
</compile_context>

<pallas_src>
import functools

import jax
import jax.numpy as jnp
from jax.experimental import pallas as pl
from jax.experimental.pallas import tpu as pltpu

LANE = 128
SUBLANE = 8


def _round_up(x, m):
    return (x + m - 1) // m * m


def _cdiv(a, b):
    return -(-a // b)


def _flatten_mlp_kernel(*refs, has_action):
    if has_action:
        (obs_ref, act_ref, w1o_ref, w1a_ref, b1_ref,
         w2_ref, b2_ref, wq_ref, bq_ref, out_ref) = refs
    else:
        (obs_ref, w1o_ref, b1_ref,
         w2_ref, b2_ref, wq_ref, bq_ref, out_ref) = refs

    # fc1: relu([obs | act] @ W1 + b1) as split dots (torch.cat folded away).
    # Inputs arrive f32; cast to bf16 in-vreg right before the MXU.
    h1 = jnp.dot(obs_ref[...].astype(jnp.bfloat16), w1o_ref[...],
                 preferred_element_type=jnp.float32)
    if has_action:
        h1 = h1 + jnp.dot(act_ref[...].astype(jnp.bfloat16), w1a_ref[...],
                          preferred_element_type=jnp.float32)
    h1 = jnp.maximum(h1 + b1_ref[...], 0.0)                     # f32 elementwise

    # fc2 + ReLU.
    h2 = jnp.dot(h1.astype(jnp.bfloat16), w2_ref[...],
                 preferred_element_type=jnp.float32) + b2_ref[...]
    h2 = jnp.maximum(h2, 0.0)

    # q head (output block is the full out_dims width -> no lane padding).
    q = jnp.dot(h2.astype(jnp.bfloat16), wq_ref[...],
                preferred_element_type=jnp.float32) + bq_ref[...]
    out_ref[...] = q.astype(out_ref.dtype)


def prepare_params(params, obs_dims, has_action=True):
    """One-time param prep (do NOT call per forward step).

    Splits fc1 into its obs/action halves, casts weights to bf16 in [in, out]
    layout, keeps biases as f32 [1, out] rows.
    """
    w1 = params["w1"]
    prepped = dict(
        b1=params["b1"].astype(jnp.float32),
        w2=params["w2"].astype(jnp.bfloat16),
        b2=params["b2"].astype(jnp.float32),
        wq=params["wq"].astype(jnp.bfloat16),
        bq=params["bq"].astype(jnp.float32),
    )
    if has_action:
        prepped["w1o"] = w1[:obs_dims].astype(jnp.bfloat16)
        prepped["w1a"] = w1[obs_dims:].astype(jnp.bfloat16)
    else:
        prepped["w1o"] = w1.astype(jnp.bfloat16)
    return prepped


def flatten_mlp_forward(obs, prepped, action=None, *, tile_batch=1024):
    """q = W_q·relu(W2·relu(W1·[obs,act] + b1) + b2) + b_q."""
    has_action = action is not None
    batch, obs_dims = obs.shape
    hidden = prepped["w2"].shape[0]
    out_dims = prepped["wq"].shape[1]

    # Balanced batch tiling: avoid the round_up(batch, tb) ~2x blow-up and give
    # v7x's 2 TensorCores >=2 grid steps whenever the batch allows.
    min_tiles = 2 if batch > SUBLANE else 1
    n_tiles = max(_cdiv(batch, tile_batch), min_tiles)
    tb = _round_up(_cdiv(batch, n_tiles), SUBLANE)
    n_tiles = _cdiv(batch, tb)
    padded_batch = tb * n_tiles

    def pad_rows(x):
        if padded_batch == x.shape[0]:
            return x
        return jnp.pad(x, ((0, padded_batch - x.shape[0]), (0, 0)))

    obs_in = pad_rows(obs.astype(jnp.float32))

    def batch_spec(d):
        return pl.BlockSpec((tb, d), lambda i: (i, 0))

    def const_spec(shape):
        # Resident weights/biases: constant block index -> single-buffer them.
        return pl.BlockSpec(shape, lambda i: (0, 0),
                            pipeline_mode=pl.Buffered(1))

    ins = [obs_in]
    in_specs = [batch_spec(obs_dims)]
    if has_action:
        act_dims = action.shape[1]
        act_in = pad_rows(action.astype(jnp.float32))
        ins += [act_in, prepped["w1o"], prepped["w1a"]]
        in_specs += [batch_spec(act_dims),
                     const_spec(prepped["w1o"].shape),
                     const_spec(prepped["w1a"].shape)]
        k1 = obs_dims + act_dims
    else:
        ins += [prepped["w1o"]]
        in_specs += [const_spec(prepped["w1o"].shape)]
        k1 = obs_dims
    ins += [prepped["b1"], prepped["w2"], prepped["b2"],
            prepped["wq"], prepped["bq"]]
    in_specs += [const_spec(prepped["b1"].shape), const_spec(prepped["w2"].shape),
                 const_spec(prepped["b2"].shape), const_spec(prepped["wq"].shape),
                 const_spec(prepped["bq"].shape)]

    kernel = functools.partial(_flatten_mlp_kernel, has_action=has_action)

    flops = 2 * padded_batch * (k1 * hidden + hidden * hidden + hidden * out_dims)
    bytes_accessed = (
        padded_batch * (k1 + out_dims) * 4                          # f32 in/out
        + (k1 * hidden + hidden * hidden + hidden * out_dims) * 2   # bf16 weights
        + (2 * hidden + out_dims) * 4)                              # f32 biases

    out = pl.pallas_call(
        kernel,
        out_shape=jax.ShapeDtypeStruct((padded_batch, out_dims), jnp.float32),
        grid=(n_tiles,),
        in_specs=in_specs,
        out_specs=pl.BlockSpec((tb, out_dims), lambda i: (i, 0)),
        compiler_params=pltpu.CompilerParams(
            dimension_semantics=("parallel",),          # v7x: shard batch over 2 TCs
            vmem_limit_bytes=64 * 1024 * 1024,
        ),
        cost_estimate=pl.CostEstimate(
            flops=flops, transcendentals=0, bytes_accessed=bytes_accessed),
    )(*ins)

    return out if padded_batch == batch else out[:batch]


def init_params(key, input_dims, action_dims, hidden_size):
    """Deterministic synthetic parameters mirroring the PyTorch module.

    fc1: Linear(input_dims + action_dims, hidden), fc2: Linear(hidden, hidden),
    q_value: Linear(hidden, action_dims).  Weights stored as [in, out] (f32).
    """
    ks = jax.random.split(key, 6)

    def lin(kw, kb, fan_in, fan_out):
        bound = 1.0 / jnp.sqrt(fan_in)                  # PyTorch default init
        w = jax.random.uniform(kw, (fan_in, fan_out), jnp.float32, -bound, bound)
        b = jax.random.uniform(kb, (1, fan_out), jnp.float32, -bound, bound)
        return w, b

    w1, b1 = lin(ks[0], ks[1], input_dims + action_dims, hidden_size)
    w2, b2 = lin(ks[2], ks[3], hidden_size, hidden_size)
    wq, bq = lin(ks[4], ks[5], hidden_size, action_dims)
    return dict(w1=w1, b1=b1, w2=w2, b2=b2, wq=wq, bq=bq)


def _reference_forward_f32(obs, action, params):
    x = jnp.concatenate([obs, action], axis=1) if action is not None else obs
    h1 = jnp.maximum(x @ params["w1"] + params["b1"], 0.0)
    h2 = jnp.maximum(h1 @ params["w2"] + params["b2"], 0.0)
    return h2 @ params["wq"] + params["bq"]


def _reference_forward_bf16(obs, action, params):
    """Precision-matched reference: bf16 operands into dots, f32 accumulation."""
    def dot(a, b):
        return jnp.dot(a.astype(jnp.bfloat16), b.astype(jnp.bfloat16),
                       preferred_element_type=jnp.float32)
    x = jnp.concatenate([obs, action], axis=1) if action is not None else obs
    h1 = jnp.maximum(dot(x, params["w1"]) + params["b1"], 0.0)
    h2 = jnp.maximum(dot(h1, params["w2"]) + params["b2"], 0.0)
    return dot(h2, params["wq"]) + params["bq"]


if __name__ == "__main__":
    # Small shapes consistent with the module (critic: obs + action -> q values).
    batch = 8
    input_dims = 16
    action_dims = 8
    hidden_size = 32

    key = jax.random.PRNGKey(0)
    k_obs, k_act, k_params = jax.random.split(key, 3)

    obs = jax.random.normal(k_obs, (batch, input_dims), dtype=jnp.float32)
    action = jax.random.normal(k_act, (batch, action_dims), dtype=jnp.float32)
    params = init_params(k_params, input_dims, action_dims, hidden_size)

    # One-time prep (bf16 weights, fc1 split); reused across all forward calls.
    prepped = prepare_params(params, input_dims, has_action=True)

    q = flatten_mlp_forward(obs, prepped, action)
    jax.block_until_ready(q)

    q_bf16_ref = _reference_forward_bf16(obs, action, params)
    q_f32_ref = _reference_forward_f32(obs, action, params)

    assert q.shape == (batch, action_dims)
    # Tight check against a bf16-matched reference.
    assert jnp.allclose(q, q_bf16_ref, atol=2e-4, rtol=2e-4)
    # Loose check against the full-f32 module semantics (bf16 MXU rounding).
    assert jnp.allclose(q, q_f32_ref, atol=5e-2, rtol=5e-2)

    print("KERNEL_OK")
</pallas_src>

<mosaic_0001>
module attributes {stable_mosaic.version = 11 : i64} {
  func.func @_flatten_mlp_kernel(%arg0: i32, %arg1: memref<8x16xf32, #tpu.memory_space<vmem>>, %arg2: memref<8x8xf32, #tpu.memory_space<vmem>>, %arg3: memref<16x32xbf16, #tpu.memory_space<vmem>>, %arg4: memref<8x32xbf16, #tpu.memory_space<vmem>>, %arg5: memref<1x32xf32, #tpu.memory_space<vmem>>, %arg6: memref<32x32xbf16, #tpu.memory_space<vmem>>, %arg7: memref<1x32xf32, #tpu.memory_space<vmem>>, %arg8: memref<32x8xbf16, #tpu.memory_space<vmem>>, %arg9: memref<1x8xf32, #tpu.memory_space<vmem>>, %arg10: memref<8x8xf32, #tpu.memory_space<vmem>>) attributes {dimension_semantics = [#tpu.dimension_semantics<parallel>], iteration_bounds = array<i64: 1>, scalar_prefetch = 0 : i64, scratch_operands = 0 : i64, tpu.core_type = #tpu.core_type<tc>, window_params = [{transform_indices = @transform_0, window_bounds = array<i64: 8, 16>}, {transform_indices = @transform_1, window_bounds = array<i64: 8, 8>}, {pipeline_mode = #tpu.pipeline_mode<synchronous>, transform_indices = @transform_2, window_bounds = array<i64: 16, 32>}, {pipeline_mode = #tpu.pipeline_mode<synchronous>, transform_indices = @transform_3, window_bounds = array<i64: 8, 32>}, {pipeline_mode = #tpu.pipeline_mode<synchronous>, transform_indices = @transform_4, window_bounds = array<i64: 1, 32>}, {pipeline_mode = #tpu.pipeline_mode<synchronous>, transform_indices = @transform_5, window_bounds = array<i64: 32, 32>}, {pipeline_mode = #tpu.pipeline_mode<synchronous>, transform_indices = @transform_6, window_bounds = array<i64: 1, 32>}, {pipeline_mode = #tpu.pipeline_mode<synchronous>, transform_indices = @transform_7, window_bounds = array<i64: 32, 8>}, {pipeline_mode = #tpu.pipeline_mode<synchronous>, transform_indices = @transform_8, window_bounds = array<i64: 1, 8>}, {transform_indices = @transform_9, window_bounds = array<i64: 8, 8>}]} {
    %c0 = arith.constant 0 : index
    %c0_0 = arith.constant 0 : index
    %0 = vector.load %arg1[%c0, %c0_0] : memref<8x16xf32, #tpu.memory_space<vmem>>, vector<8x16xf32>
    %1 = arith.truncf %0 : vector<8x16xf32> to vector<8x16xbf16>
    %c0_1 = arith.constant 0 : index
    %c0_2 = arith.constant 0 : index
    %2 = vector.load %arg3[%c0_1, %c0_2] : memref<16x32xbf16, #tpu.memory_space<vmem>>, vector<16x32xbf16>
    %cst = arith.constant dense<0.000000e+00> : vector<8x32xf32>
    %3 = tpu.matmul %1, %2, %cst {dimension_numbers = #tpu.dot_dimension_numbers<[1], [0], [0], [1], [0, 0, 1, 1], [], []>} : vector<8x16xbf16>, vector<16x32xbf16>, vector<8x32xf32> -> vector<8x32xf32>
    %c0_3 = arith.constant 0 : index
    %c0_4 = arith.constant 0 : index
    %4 = vector.load %arg2[%c0_3, %c0_4] : memref<8x8xf32, #tpu.memory_space<vmem>>, vector<8x8xf32>
    %5 = arith.truncf %4 : vector<8x8xf32> to vector<8x8xbf16>
    %c0_5 = arith.constant 0 : index
    %c0_6 = arith.constant 0 : index
    %6 = vector.load %arg4[%c0_5, %c0_6] : memref<8x32xbf16, #tpu.memory_space<vmem>>, vector<8x32xbf16>
    %cst_7 = arith.constant dense<0.000000e+00> : vector<8x32xf32>
    %7 = tpu.matmul %5, %6, %cst_7 {dimension_numbers = #tpu.dot_dimension_numbers<[1], [0], [0], [1], [0, 0, 1, 1], [], []>} : vector<8x8xbf16>, vector<8x32xbf16>, vector<8x32xf32> -> vector<8x32xf32>
    %8 = arith.addf %3, %7 : vector<8x32xf32>
    %c0_8 = arith.constant 0 : index
    %c0_9 = arith.constant 0 : index
    %9 = vector.load %arg5[%c0_8, %c0_9] : memref<1x32xf32, #tpu.memory_space<vmem>>, vector<1x32xf32>
    %10 = vector.broadcast %9 : vector<1x32xf32> to vector<8x32xf32>
    %11 = arith.addf %8, %10 : vector<8x32xf32>
    %cst_10 = arith.constant 0.000000e+00 : f32
    %12 = vector.broadcast %cst_10 : f32 to vector<8x32xf32>
    %13 = arith.maximumf %11, %12 : vector<8x32xf32>
    %14 = arith.truncf %13 : vector<8x32xf32> to vector<8x32xbf16>
    %c0_11 = arith.constant 0 : index
    %c0_12 = arith.constant 0 : index
    %15 = vector.load %arg6[%c0_11, %c0_12] : memref<32x32xbf16, #tpu.memory_space<vmem>>, vector<32x32xbf16>
    %cst_13 = arith.constant dense<0.000000e+00> : vector<8x32xf32>
    %16 = tpu.matmul %14, %15, %cst_13 {dimension_numbers = #tpu.dot_dimension_numbers<[1], [0], [0], [1], [0, 0, 1, 1], [], []>} : vector<8x32xbf16>, vector<32x32xbf16>, vector<8x32xf32> -> vector<8x32xf32>
    %c0_14 = arith.constant 0 : index
    %c0_15 = arith.constant 0 : index
    %17 = vector.load %arg7[%c0_14, %c0_15] : memref<1x32xf32, #tpu.memory_space<vmem>>, vector<1x32xf32>
    %18 = vector.broadcast %17 : vector<1x32xf32> to vector<8x32xf32>
    %19 = arith.addf %16, %18 : vector<8x32xf32>
    %cst_16 = arith.constant 0.000000e+00 : f32
    %20 = vector.broadcast %cst_16 : f32 to vector<8x32xf32>
    %21 = arith.maximumf %19, %20 : vector<8x32xf32>
    %22 = arith.truncf %21 : vector<8x32xf32> to vector<8x32xbf16>
    %c0_17 = arith.constant 0 : index
    %c0_18 = arith.constant 0 : index
    %23 = vector.load %arg8[%c0_17, %c0_18] : memref<32x8xbf16, #tpu.memory_space<vmem>>, vector<32x8xbf16>
    %cst_19 = arith.constant dense<0.000000e+00> : vector<8x8xf32>
    %24 = tpu.matmul %22, %23, %cst_19 {dimension_numbers = #tpu.dot_dimension_numbers<[1], [0], [0], [1], [0, 0, 1, 1], [], []>} : vector<8x32xbf16>, vector<32x8xbf16>, vector<8x8xf32> -> vector<8x8xf32>
    %c0_20 = arith.constant 0 : index
    %c0_21 = arith.constant 0 : index
    %25 = vector.load %arg9[%c0_20, %c0_21] : memref<1x8xf32, #tpu.memory_space<vmem>>, vector<1x8xf32>
    %26 = vector.broadcast %25 : vector<1x8xf32> to vector<8x8xf32>
    %27 = arith.addf %24, %26 : vector<8x8xf32>
    %c0_22 = arith.constant 0 : index
    %c0_23 = arith.constant 0 : index
    %28 = vector.load %arg10[%c0_22, %c0_23] : memref<8x8xf32, #tpu.memory_space<vmem>>, vector<8x8xf32>
    tpu.vector_store %arg10[%c0_22, %c0_23], %27 {strides = array<i32>} : memref<8x8xf32, #tpu.memory_space<vmem>>, vector<8x8xf32>,
    return
  }
  func.func @transform_0(%arg0: i32) -> (i32, i32) {
    %c0_i32 = arith.constant 0 : i32
    %c0_i32_0 = arith.constant 0 : i32
    return %arg0, %c0_i32 : i32, i32
  }
  func.func @transform_1(%arg0: i32) -> (i32, i32) {
    %c0_i32 = arith.constant 0 : i32
    %c0_i32_0 = arith.constant 0 : i32
    return %arg0, %c0_i32 : i32, i32
  }
  func.func @transform_2(%arg0: i32) -> (i32, i32) {
    %c0_i32 = arith.constant 0 : i32
    %c0_i32_0 = arith.constant 0 : i32
    %c0_i32_1 = arith.constant 0 : i32
    return %c0_i32, %c0_i32_0 : i32, i32
  }
  func.func @transform_3(%arg0: i32) -> (i32, i32) {
    %c0_i32 = arith.constant 0 : i32
    %c0_i32_0 = arith.constant 0 : i32
    %c0_i32_1 = arith.constant 0 : i32
    return %c0_i32, %c0_i32_0 : i32, i32
  }
  func.func @transform_4(%arg0: i32) -> (i32, i32) {
    %c0_i32 = arith.constant 0 : i32
    %c0_i32_0 = arith.constant 0 : i32
    %c0_i32_1 = arith.constant 0 : i32
    return %c0_i32, %c0_i32_0 : i32, i32
  }
  func.func @transform_5(%arg0: i32) -> (i32, i32) {
    %c0_i32 = arith.constant 0 : i32
    %c0_i32_0 = arith.constant 0 : i32
    %c0_i32_1 = arith.constant 0 : i32
    return %c0_i32, %c0_i32_0 : i32, i32
  }
  func.func @transform_6(%arg0: i32) -> (i32, i32) {
    %c0_i32 = arith.constant 0 : i32
    %c0_i32_0 = arith.constant 0 : i32
    %c0_i32_1 = arith.constant 0 : i32
    return %c0_i32, %c0_i32_0 : i32, i32
  }
  func.func @transform_7(%arg0: i32) -> (i32, i32) {
    %c0_i32 = arith.constant 0 : i32
    %c0_i32_0 = arith.constant 0 : i32
    %c0_i32_1 = arith.constant 0 : i32
    return %c0_i32, %c0_i32_0 : i32, i32
  }
  func.func @transform_8(%arg0: i32) -> (i32, i32) {
    %c0_i32 = arith.constant 0 : i32
    %c0_i32_0 = arith.constant 0 : i32
    %c0_i32_1 = arith.constant 0 : i32
    return %c0_i32, %c0_i32_0 : i32, i32
  }
  func.func @transform_9(%arg0: i32) -> (i32, i32) {
    %c0_i32 = arith.constant 0 : i32
    %c0_i32_0 = arith.constant 0 : i32
    return %arg0, %c0_i32 : i32, i32
  }
}

</mosaic_0001>

<llo_original>
// kernel: tpu_custom_call.1
$region0: #{tpu_custom_call.1}
  #allocation0 [shape = 'u32[]', space=smem, size = 0x4, offset = 0x4, fixed_abs, tag = 'smem constant byte address 0x4 - core index']
  #allocation1 [shape = 'u32[144,128]{1,0:T(1,128)}', space=vmem, size = 0x12000, scoped, tag = 'internal scratch']
  %s0 = inlined_call_operand.vmem [shape: f32[8,16], index: 0, kind: input, shape index: {}]
  %s1 = inlined_call_operand.hbm [shape: f32[8,8], index: 1, kind: input, shape index: {}]
  %s2 = inlined_call_operand.hbm [shape: bf16[16,32], index: 2, kind: input, shape index: {}]
  %s3 = inlined_call_operand.hbm [shape: bf16[8,32], index: 3, kind: input, shape index: {}]
  %s4 = inlined_call_operand.vmem [shape: f32[1,32], index: 4, kind: input, shape index: {}]
  %s5 = inlined_call_operand.vmem [shape: bf16[32,32], index: 5, kind: input, shape index: {}]
  %s6 = inlined_call_operand.vmem [shape: f32[1,32], index: 6, kind: input, shape index: {}]
  %s7 = inlined_call_operand.vmem [shape: bf16[32,8], index: 7, kind: input, shape index: {}]
  %s8 = inlined_call_operand.vmem [shape: f32[1,8], index: 8, kind: input, shape index: {}]
  %s9 = inlined_call_operand.hbm [shape: f32[8,8], index: 9, kind: output, shape index: {}]
  %s10 = sld [smem:[#allocation0]]
  $region58: #{tpu_custom_call.1} parent=0
    _
  %s12 = ssub.s32 1, %s10
  %s13 = scalar_select 0, %s12, %s10
  $region1: #{tpu_custom_call.1} parent=0
    #allocation2 [shape = 'u8[4096]{0}', space=vmem, size = 0x1000, scoped, tag = 'input window, operand 1, single buffered']
    #allocation3 [shape = 's32[1]{0}', space=sflag, size = 0x4, scoped, tag = 'scoped memory for tpu_custom_call.1']
    #allocation4 [shape = 's32[1]{0}', space=sflag, size = 0x4, scoped, tag = 'scoped memory for tpu_custom_call.1']
    #allocation5 [shape = 'u8[4096]{0}', space=vmem, size = 0x1000, scoped, tag = 'input window, operand 2, single buffered']
    #allocation6 [shape = 's32[1]{0}', space=sflag, size = 0x4, scoped, tag = 'scoped memory for tpu_custom_call.1']
    #allocation7 [shape = 'u8[2048]{0}', space=vmem, size = 0x800, scoped, tag = 'input window, operand 3, single buffered']
    #allocation8 [shape = 'u8[4096]{0}', space=vmem, size = 0x1000, scoped, tag = 'output window, operand 0, single buffered']
    %14 = vsyncpa [#allocation3], 0
    %15 = vsyncpa [#allocation6], 0
    %16 = vsyncpa [#allocation4], 0
    // Predicated region
    $region2: #{tpu_custom_call.1} parent=1 // pred_check
      _
    $region3: #{tpu_custom_call.1} parent=1 // pred_check_branch
      %18 = sbr.rel (0) target = $region5
    $region4: #{tpu_custom_call.1} parent=1 // pred_region
      _
    $region5: #{tpu_custom_call.1} parent=1 // pred_fallthru
      _
    // Predicated region
    $region6: #{tpu_custom_call.1} parent=1 // pred_check
      _
    $region7: #{tpu_custom_call.1} parent=1 // pred_check_branch
      %20 = sbr.rel (0) target = $region9
    $region8: #{tpu_custom_call.1} parent=1 // pred_region
      %s22 = ssub.s32 128, 128
      %23 = vsyncadd [#allocation3], %s22
      %s25 = sshll.u32 [#allocation2], 4
      %s26 = int_to_ptr.vmem [resolvable:$true] %s25
      %28 = dma.hbm_to_vmem [thread:$0]  %s1, 128, %s26, [#allocation3]
    $region9: #{tpu_custom_call.1} parent=1 // pred_fallthru
      _
    // Predicated region
    $region10: #{tpu_custom_call.1} parent=1 // pred_check
      _
    $region11: #{tpu_custom_call.1} parent=1 // pred_check_branch
      %30 = sbr.rel (0) target = $region13
    $region12: #{tpu_custom_call.1} parent=1 // pred_region
      %s32 = ssub.s32 128, 128
      %33 = vsyncadd [#allocation6], %s32
      %s34 = sshll.u32 [#allocation5], 4
      %s35 = int_to_ptr.vmem [resolvable:$true] %s34
      %40 = dma.hbm_to_vmem [thread:$0]  %s2, 128, %s35, [#allocation6], 64, 64, 4
    $region13: #{tpu_custom_call.1} parent=1 // pred_fallthru
      _
    // Predicated region
    $region14: #{tpu_custom_call.1} parent=1 // pred_check
      _
    $region15: #{tpu_custom_call.1} parent=1 // pred_check_branch
      %42 = sbr.rel (0) target = $region17
    $region16: #{tpu_custom_call.1} parent=1 // pred_region
      %s44 = ssub.s32 64, 64
      %45 = vsyncadd [#allocation6], %s44
      %s47 = sshll.u32 [#allocation7], 4
      %s48 = int_to_ptr.vmem [resolvable:$true] %s47
      %50 = dma.hbm_to_vmem [thread:$0]  %s3, 64, %s48, [#allocation6]
    $region17: #{tpu_custom_call.1} parent=1 // pred_fallthru
      _
    // Predicated region
    $region18: #{tpu_custom_call.1} parent=1 // pred_check
      _
    $region19: #{tpu_custom_call.1} parent=1 // pred_check_branch
      %52 = sbr.rel (0) target = $region21
    $region20: #{tpu_custom_call.1} parent=1 // pred_region
      _
    $region21: #{tpu_custom_call.1} parent=1 // pred_fallthru
      _
    // Predicated region
    $region22: #{tpu_custom_call.1} parent=1 // pred_check
      _
    $region23: #{tpu_custom_call.1} parent=1 // pred_check_branch
      %54 = sbr.rel (0) target = $region25
    $region24: #{tpu_custom_call.1} parent=1 // pred_region
      _
    $region25: #{tpu_custom_call.1} parent=1 // pred_fallthru
      _
    // Predicated region
    $region26: #{tpu_custom_call.1} parent=1 // pred_check
      _
    $region27: #{tpu_custom_call.1} parent=1 // pred_check_branch
      %56 = sbr.rel (0) target = $region29
    $region28: #{tpu_custom_call.1} parent=1 // pred_region
      _
    $region29: #{tpu_custom_call.1} parent=1 // pred_fallthru
      _
    // Predicated region
    $region30: #{tpu_custom_call.1} parent=1 // pred_check
      _
    $region31: #{tpu_custom_call.1} parent=1 // pred_check_branch
      %58 = sbr.rel (0) target = $region33
    $region32: #{tpu_custom_call.1} parent=1 // pred_region
      _
    $region33: #{tpu_custom_call.1} parent=1 // pred_fallthru
      _
    // Predicated region
    $region34: #{tpu_custom_call.1} parent=1 // pred_check
      _
    $region35: #{tpu_custom_call.1} parent=1 // pred_check_branch
      %60 = sbr.rel (0) target = $region37
    $region36: #{tpu_custom_call.1} parent=1 // pred_region
      _
    $region37: #{tpu_custom_call.1} parent=1 // pred_fallthru
      _
    // Predicated region
    $region38: #{tpu_custom_call.1} parent=1 // pred_check
      _
    $region39: #{tpu_custom_call.1} parent=1 // pred_check_branch
      %62 = sbr.rel (0) target = $region41
    $region40: #{tpu_custom_call.1} parent=1 // pred_region
      %63 = dma.done [#allocation3], 128
    $region41: #{tpu_custom_call.1} parent=1 // pred_fallthru
      _
    // Predicated region
    $region42: #{tpu_custom_call.1} parent=1 // pred_check
      _
    $region43: #{tpu_custom_call.1} parent=1 // pred_check_branch
      %65 = sbr.rel (0) target = $region45
    $region44: #{tpu_custom_call.1} parent=1 // pred_region
      %66 = dma.done [#allocation6], 128
    $region45: #{tpu_custom_call.1} parent=1 // pred_fallthru
      _
    // Predicated region
    $region46: #{tpu_custom_call.1} parent=1 // pred_check
      _
    $region47: #{tpu_custom_call.1} parent=1 // pred_check_branch
      %68 = sbr.rel (0) target = $region49
    $region48: #{tpu_custom_call.1} parent=1 // pred_region
      %69 = dma.done [#allocation6], 64
    $region49: #{tpu_custom_call.1} parent=1 // pred_fallthru
      _
    %v71 = vld [vmem:[%s0] sm:$0xff]
    %v72 = vpack.c.bf16 %v71, %v71
    %v73 = vld [vmem:[#allocation5] sm:$0xf]
    %v74 = vld [vmem:[#allocation5 + $0x4] sm:$0xf]
    %v75 = vld [vmem:[#allocation2] sm:$0xff]
    %v76 = vpack.c.bf16 %v75, %v75
    %v77 = vld [vmem:[#allocation7] sm:$0xf]
    %vm78 = vcmask 64512
    %v80 = vsel %vm78, %v76, 0
    %vm82 = vcmask 1043456
    %v84 = vsel %vm82, %v77, 0
    %86 = vmatprep.subr.bf16.mxu0 0
    %87 = vmatpush1.bf16.msra.mxu0 0
    %88 = vmatprep.subr.bf16.mxu0 0
    %89 = vmatpush1.bf16.msra.mxu0 0
    %90 = vmatprep.subr.bf16.mxu0 0
    %91 = vmatpush1.bf16.msra.mxu0 0
    %92 = vmatprep.subr.bf16.mxu0 0
    %93 = vmatpush1.bf16.msra.mxu0 0
    %94 = vmatprep.subr.bf16.mxu0 0
    %95 = vmatpush1.bf16.msra.mxu0 0
    %96 = vmatprep.subr.bf16.mxu0 0
    %97 = vmatpush1.bf16.msra.mxu0 0
    %98 = vmatprep.subr.bf16.mxu0 0
    %99 = vmatpush1.bf16.msra.mxu0 0
    %100 = vmatprep.subr.bf16.mxu0 0
    %101 = vmatpush1.bf16.msra.mxu0 %v84
    %102 = vmatprep.subr.bf16.mxu0 0
    %103 = vmatpush2.bf16.msra.mxu0 0
    %104 = vmatprep.subr.bf16.mxu0 0
    %105 = vmatpush2.bf16.msra.mxu0 0
    %106 = vmatprep.subr.bf16.mxu0 0
    %107 = vmatpush2.bf16.msra.mxu0 0
    %108 = vmatprep.subr.bf16.mxu0 0
    %109 = vmatpush2.bf16.msra.mxu0 0
    %110 = vmatprep.subr.bf16.mxu0 0
    %111 = vmatpush2.bf16.msra.mxu0 0
    %112 = vmatprep.subr.bf16.mxu0 0
    %113 = vmatpush2.bf16.msra.mxu0 0
    %114 = vmatprep.subr.bf16.mxu0 0
    %115 = vmatpush2.bf16.msra.mxu0 0
    %116 = vmatprep.subr.bf16.mxu0 0
    %117 = vmatpush2.bf16.msra.mxu0 0
    %118 = vmatprep.mubr.bf16.mxu0 0
    %119 = vmatmul.mubr.bf16.gmra.mxu0 %v80
    %v120 = vpop.f32.mrf.mxu0
    %v121 = vadd.f32 0.0, %v120
    %v122 = vpop.f32.mrf.mxu0
    %v123 = vpop.f32.mrf.mxu0
    %v124 = vpop.f32.mrf.mxu0
    %125 = vdwg.mxu0
    %v128 = vunpack.c.l.b16 %v73
    %v129 = vunpack.c.l.b16 %v74
    %v130 = vpack.c.b16 %v129, %v128
    %vm132 = vcmask 130048
    %v134 = vsel %vm132, %v72, 0
    %136 = vmatprep.subr.bf16.mxu0 0
    %137 = vmatpush1.bf16.msra.mxu0 0
    %138 = vmatprep.subr.bf16.mxu0 0
    %139 = vmatpush1.bf16.msra.mxu0 0
    %140 = vmatprep.subr.bf16.mxu0 0
    %141 = vmatpush1.bf16.msra.mxu0 0
    %142 = vmatprep.subr.bf16.mxu0 0
    %143 = vmatpush1.bf16.msra.mxu0 0
    %144 = vmatprep.subr.bf16.mxu0 0
    %145 = vmatpush1.bf16.msra.mxu0 0
    %146 = vmatprep.subr.bf16.mxu0 0
    %147 = vmatpush1.bf16.msra.mxu0 0
    %148 = vmatprep.subr.bf16.mxu0 0
    %149 = vmatpush1.bf16.msra.mxu0 0
    %150 = vmatprep.subr.bf16.mxu0 0
    %151 = vmatpush1.bf16.msra.mxu0 %v130
    %152 = vmatprep.subr.bf16.mxu0 0
    %153 = vmatpush2.bf16.msra.mxu0 0
    %154 = vmatprep.subr.bf16.mxu0 0
    %155 = vmatpush2.bf16.msra.mxu0 0
    %156 = vmatprep.subr.bf16.mxu0 0
    %157 = vmatpush2.bf16.msra.mxu0 0
    %158 = vmatprep.subr.bf16.mxu0 0
    %159 = vmatpush2.bf16.msra.mxu0 0
    %160 = vmatprep.subr.bf16.mxu0 0
    %161 = vmatpush2.bf16.msra.mxu0 0
    %162 = vmatprep.subr.bf16.mxu0 0
    %163 = vmatpush2.bf16.msra.mxu0 0
    %164 = vmatprep.subr.bf16.mxu0 0
    %165 = vmatpush2.bf16.msra.mxu0 0
    %166 = vmatprep.subr.bf16.mxu0 0
    %167 = vmatpush2.bf16.msra.mxu0 0
    %168 = vmatprep.mubr.bf16.mxu0 0
    %169 = vmatmul.mubr.bf16.gmra.mxu0 %v134
    %v170 = vpop.f32.mrf.mxu0
    %v171 = vadd.f32 %v121, %v170
    %v172 = vpop.f32.mrf.mxu0
    %v173 = vpop.f32.mrf.mxu0
    %v174 = vpop.f32.mrf.mxu0
    %175 = vdwg.mxu0
    %v176 = vld [vmem:[%s4] sm:$0x1]
    %v178 = vlaneseq
    %v179 = vshrl.u32 %v178, 7
    %v180 = vsub.s32 0, %v179
    %v181 = vrot.slane %v176, %v180
    %v183 = vadd.f32 %v171, %v181
    %v184 = vmax.f32 %v183, 0.0
    %v185 = vpack.c.bf16 %v184, %v184
    %v186 = vld [vmem:[%s5] sm:$0xf]
    %v187 = vld [vmem:[%s5 + $0x4] sm:$0xf]
    %v188 = vld [vmem:[%s5 + $0x8] sm:$0xf]
    %v189 = vld [vmem:[%s5 + $0xc] sm:$0xf]
    %v190 = vld [vmem:[%s6] sm:$0x1]
    %v192 = vlaneseq
    %v193 = vshrl.u32 %v192, 7
    %v194 = vsub.s32 0, %v193
    %v195 = vrot.slane %v190, %v194
    %v201 = vunpack.c.l.b16 %v186
    %v202 = vunpack.c.l.b16 %v187
    %v203 = vunpack.c.l.b16 %v188
    %v204 = vunpack.c.l.b16 %v189
    %v205 = vpack.c.b16 %v202, %v201
    %v206 = vpack.c.b16 %v204, %v203
    %vm209 = vcmask 261120
    %v211 = vsel %vm209, %v185, 0
    %213 = vmatprep.subr.bf16.mxu0 0
    %214 = vmatpush1.bf16.msra.mxu0 0
    %215 = vmatprep.subr.bf16.mxu0 0
    %216 = vmatpush1.bf16.msra.mxu0 0
    %217 = vmatprep.subr.bf16.mxu0 0
    %218 = vmatpush1.bf16.msra.mxu0 0
    %219 = vmatprep.subr.bf16.mxu0 0
    %220 = vmatpush1.bf16.msra.mxu0 0
    %221 = vmatprep.subr.bf16.mxu0 0
    %222 = vmatpush1.bf16.msra.mxu0 0
    %223 = vmatprep.subr.bf16.mxu0 0
    %224 = vmatpush1.bf16.msra.mxu0 0
    %225 = vmatprep.subr.bf16.mxu0 0
    %226 = vmatpush1.bf16.msra.mxu0 %v206
    %227 = vmatprep.subr.bf16.mxu0 0
    %228 = vmatpush1.bf16.msra.mxu0 %v205
    %229 = vmatprep.subr.bf16.mxu0 0
    %230 = vmatpush2.bf16.msra.mxu0 0
    %231 = vmatprep.subr.bf16.mxu0 0
    %232 = vmatpush2.bf16.msra.mxu0 0
    %233 = vmatprep.subr.bf16.mxu0 0
    %234 = vmatpush2.bf16.msra.mxu0 0
    %235 = vmatprep.subr.bf16.mxu0 0
    %236 = vmatpush2.bf16.msra.mxu0 0
    %237 = vmatprep.subr.bf16.mxu0 0
    %238 = vmatpush2.bf16.msra.mxu0 0
    %239 = vmatprep.subr.bf16.mxu0 0
    %240 = vmatpush2.bf16.msra.mxu0 0
    %241 = vmatprep.subr.bf16.mxu0 0
    %242 = vmatpush2.bf16.msra.mxu0 0
    %243 = vmatprep.subr.bf16.mxu0 0
    %244 = vmatpush2.bf16.msra.mxu0 0
    %245 = vmatprep.mubr.bf16.mxu0 0
    %246 = vmatmul.mubr.bf16.gmra.mxu0 %v211
    %v247 = vpop.f32.mrf.mxu0
    %v248 = vadd.f32 %v195, %v247
    %v249 = vpop.f32.mrf.mxu0
    %v250 = vpop.f32.mrf.mxu0
    %v251 = vpop.f32.mrf.mxu0
    %252 = vdwg.mxu0
    %v253 = vmax.f32 %v248, 0.0
    %v254 = vpack.c.bf16 %v253, %v253
    %v255 = vld [vmem:[%s7] sm:$0xf]
    %v256 = vld [vmem:[%s7 + $0x4] sm:$0xf]
    %v257 = vld [vmem:[%s7 + $0x8] sm:$0xf]
    %v258 = vld [vmem:[%s7 + $0xc] sm:$0xf]
    %v259 = vld [vmem:[%s8] sm:$0x1]
    %v261 = vlaneseq
    %v262 = vshrl.u32 %v261, 7
    %v263 = vsub.s32 0, %v262
    %v264 = vrot.slane %v259, %v263
    %v270 = vunpack.c.l.b16 %v255
    %v271 = vunpack.c.l.b16 %v256
    %v272 = vunpack.c.l.b16 %v257
    %v273 = vunpack.c.l.b16 %v258
    %v274 = vpack.c.b16 %v271, %v270
    %v275 = vpack.c.b16 %v273, %v272
    %v279 = vsel %vm209, %v254, 0
    %281 = vmatprep.subr.bf16.mxu0 0
    %282 = vmatpush1.bf16.msra.mxu0 0
    %283 = vmatprep.subr.bf16.mxu0 0
    %284 = vmatpush1.bf16.msra.mxu0 0
    %285 = vmatprep.subr.bf16.mxu0 0
    %286 = vmatpush1.bf16.msra.mxu0 0
    %287 = vmatprep.subr.bf16.mxu0 0
    %288 = vmatpush1.bf16.msra.mxu0 0
    %289 = vmatprep.subr.bf16.mxu0 0
    %290 = vmatpush1.bf16.msra.mxu0 0
    %291 = vmatprep.subr.bf16.mxu0 0
    %292 = vmatpush1.bf16.msra.mxu0 0
    %293 = vmatprep.subr.bf16.mxu0 0
    %294 = vmatpush1.bf16.msra.mxu0 %v275
    %295 = vmatprep.subr.bf16.mxu0 0
    %296 = vmatpush1.bf16.msra.mxu0 %v274
    %297 = vmatprep.subr.bf16.mxu0 0
    %298 = vmatpush2.bf16.msra.mxu0 0
    %299 = vmatprep.subr.bf16.mxu0 0
    %300 = vmatpush2.bf16.msra.mxu0 0
    %301 = vmatprep.subr.bf16.mxu0 0
    %302 = vmatpush2.bf16.msra.mxu0 0
    %303 = vmatprep.subr.bf16.mxu0 0
    %304 = vmatpush2.bf16.msra.mxu0 0
    %305 = vmatprep.subr.bf16.mxu0 0
    %306 = vmatpush2.bf16.msra.mxu0 0
    %307 = vmatprep.subr.bf16.mxu0 0
    %308 = vmatpush2.bf16.msra.mxu0 0
    %309 = vmatprep.subr.bf16.mxu0 0
    %310 = vmatpush2.bf16.msra.mxu0 0
    %311 = vmatprep.subr.bf16.mxu0 0
    %312 = vmatpush2.bf16.msra.mxu0 0
    %313 = vmatprep.mubr.bf16.mxu0 0
    %314 = vmatmul.mubr.bf16.gmra.mxu0 %v279
    %v315 = vpop.f32.mrf.mxu0
    %v316 = vadd.f32 %v264, %v315
    %v317 = vpop.f32.mrf.mxu0
    %v318 = vpop.f32.mrf.mxu0
    %v319 = vpop.f32.mrf.mxu0
    %320 = vdwg.mxu0
    %321 = vst.msk [vmem:[#allocation8] sm:$0xff] %vm78, %v316
    // Predicated region
    $region50: #{tpu_custom_call.1} parent=1 // pred_check
      _
    $region51: #{tpu_custom_call.1} parent=1 // pred_check_branch
      %323 = sbr.rel (0) target = $region53
    $region52: #{tpu_custom_call.1} parent=1 // pred_region
      %s325 = ssub.s32 128, 128
      %326 = vsyncadd [#allocation4], %s325
      %s328 = sshll.u32 [#allocation8], 4
      %s329 = int_to_ptr.vmem [resolvable:$true] %s328
      %331 = dma.vmem_to_hbm [thread:$0]  %s329, 128, %s9, [#allocation4]
    $region53: #{tpu_custom_call.1} parent=1 // pred_fallthru
      _
    // Predicated region
    $region54: #{tpu_custom_call.1} parent=1 // pred_check
      _
    $region55: #{tpu_custom_call.1} parent=1 // pred_check_branch
      %333 = sbr.rel (0) target = $region57
    $region56: #{tpu_custom_call.1} parent=1 // pred_region
      %334 = dma.done [#allocation4], 128
    $region57: #{tpu_custom_call.1} parent=1 // pred_fallthru
      _
    %335 = vsyncpa [#allocation3], 1
    %336 = vsyncpa [#allocation6], 1
    %337 = vsyncpa [#allocation4], 1

</llo_original>
